<compile_context>
chip_gen: v5e
topology: v5e:2x2
jax: 0.10.0
libtpu: 0.0.40
codegen_flags: <defaults>
</compile_context>

<pallas_src>
import jax
import jax.numpy as jnp
from jax.experimental import pallas as pl
from jax.experimental.pallas import tpu as pltpu
import numpy as np

LANE = 128           # TPU lane width — pad the output/N dimension to a multiple of this
MAX_BLOCK_M = 1024   # upper bound on batch-tile rows; VMEM budget shrinks it as needed


def _round_up(x, m):
    return ((x + m - 1) // m) * m


def _vmem_capacity_bytes():
    # Physical VMEM per TensorCore: 128 MiB on v5e/v6e, 64 MiB on v7x.
    try:
        cap = getattr(pltpu.get_tpu_info(), "vmem_capacity_bytes", None)
        if cap:
            return int(cap)
    except Exception:
        pass
    return 64 << 20  # conservative fallback (v7x)


def _pick_block_m(n, row_bytes_pipelined, resident_weight_bytes):
    """Largest multiple-of-8 batch tile whose double-buffered x/out tiles plus
    the resident (double-buffered) weights fit ~70% of physical VMEM; for
    moderate/large batches force >=2 tiles so v7x's 2nd TensorCore gets work."""
    budget = min(int(0.7 * _vmem_capacity_bytes()), 100 << 20)
    avail = max(budget - resident_weight_bytes, 8 * row_bytes_pipelined)
    tm_cap = max(8, min(MAX_BLOCK_M, (avail // row_bytes_pipelined) // 8 * 8))
    if n <= tm_cap:
        if n >= 256:
            # Split into (at least) 2 parallel tiles for megacore sharding on
            # v7x; the ~0.35 us extra grid-step cost is noise on v5e/v6e.
            return min(tm_cap, _round_up(pl.cdiv(n, 2), 8))
        return n
    return tm_cap


def _compiler_params(vmem_need_bytes):
    kwargs = dict(dimension_semantics=("parallel",))
    if vmem_need_bytes > (12 << 20):
        cap = int(0.8 * _vmem_capacity_bytes())
        kwargs["vmem_limit_bytes"] = int(
            min(_round_up(vmem_need_bytes * 5 // 4, 1 << 20), cap))
    return pltpu.CompilerParams(**kwargs)


# ----------------------------------------------------------------------------
# Pallas kernels
# ----------------------------------------------------------------------------

def _shared_bottom_none_kernel(x_ref, wk_ref, o_ref):
    # learning_type is None:
    #   aux = inputs @ expert_kernels ; expert_outputs = relu(aux)
    #   final_outputs = Identity(expert_outputs)
    x = x_ref[...].astype(jnp.bfloat16)           # bf16 MXU operands, f32 accumulate
    aux = jnp.dot(x, wk_ref[...], preferred_element_type=jnp.float32)
    o_ref[...] = jnp.maximum(aux, 0.0).astype(o_ref.dtype)


def _shared_bottom_expert2_kernel(x_ref, wk_ref, wlt_ref, bl_ref, o_ref):
    # learning_type == 'Expert_2layers':
    #   aux = inputs @ expert_kernels
    #   expert_outputs = relu(dropout(aux))      # dropout in eval mode = identity
    #   final_outputs  = sigmoid(expert_outputs @ W^T + b)
    x = x_ref[...].astype(jnp.bfloat16)
    aux = jnp.dot(x, wk_ref[...], preferred_element_type=jnp.float32)
    h = jnp.maximum(aux, 0.0).astype(jnp.bfloat16)
    # wlt is W^T prepared once on the host -> plain (1,0) contraction on the MXU.
    z = jnp.dot(h, wlt_ref[...], preferred_element_type=jnp.float32)
    o_ref[...] = jax.nn.sigmoid(z + bl_ref[...]).astype(o_ref.dtype)


# ----------------------------------------------------------------------------
# Factories: one-time weight prep (cast/pad/transpose), per-call pallas_call
# ----------------------------------------------------------------------------

def make_shared_bottom_none(expert_kernels):
    """learning_type=None path.  expert_kernels: (f, r) float."""
    f, r = expert_kernels.shape
    r_pad = max(LANE, _round_up(r, LANE))
    wk = expert_kernels.astype(jnp.bfloat16)
    if r_pad != r:
        wk = jnp.pad(wk, ((0, 0), (0, r_pad - r)))       # lane-dense stores / MXU cols
    resident_weight_bytes = 2 * (f * r_pad * 2)          # default double-buffered

    def call(inputs):
        n, f_in = inputs.shape
        assert f_in == f
        x_bytes = inputs.dtype.itemsize
        row_bytes = 2 * f * x_bytes + 2 * r_pad * 4      # 2x x tile + 2x out tile / row
        tm = _pick_block_m(n, row_bytes, resident_weight_bytes)
        grid = (pl.cdiv(n, tm),)
        out = pl.pallas_call(
            _shared_bottom_none_kernel,
            out_shape=jax.ShapeDtypeStruct((n, r_pad), jnp.float32),
            grid=grid,
            in_specs=[
                pl.BlockSpec((tm, f), lambda i: (i, 0)),       # batch-tiled, pipelined
                pl.BlockSpec((f, r_pad), lambda i: (0, 0)),    # VMEM-resident weights
            ],
            out_specs=pl.BlockSpec((tm, r_pad), lambda i: (i, 0)),
            compiler_params=_compiler_params(tm * row_bytes + resident_weight_bytes),
            cost_estimate=pl.CostEstimate(
                flops=2 * n * f * r_pad,
                transcendentals=0,
                bytes_accessed=n * f * x_bytes + f * r_pad * 2 + n * r_pad * 4),
        )(inputs, wk)
        # Skip the extra copy pass entirely when r is already lane-aligned.
        return out if r_pad == r else out[:, :r]

    return call


def make_shared_bottom_expert2(expert_kernels, linear_w, linear_b):
    """learning_type='Expert_2layers' path.

    expert_kernels: (f, r); linear_w: (r, r) torch-layout (out, in); linear_b: (r,).
    """
    f, r = expert_kernels.shape
    r_pad = max(LANE, _round_up(r, LANE))
    pad_n = r_pad - r

    wk = expert_kernels.astype(jnp.bfloat16)
    wlt = jnp.transpose(linear_w).astype(jnp.bfloat16)      # one-time host transpose
    bl = linear_b.astype(jnp.float32).reshape(1, r)
    if pad_n:
        # Padded hidden columns are relu(x@0)=0 and contribute nothing to valid
        # output columns; padded output columns carry sigmoid(0)=0.5 garbage and
        # are sliced off in `call`.
        wk = jnp.pad(wk, ((0, 0), (0, pad_n)))
        wlt = jnp.pad(wlt, ((0, pad_n), (0, pad_n)))
        bl = jnp.pad(bl, ((0, 0), (0, pad_n)))
    resident_weight_bytes = 2 * (f * r_pad * 2 + r_pad * r_pad * 2 + r_pad * 4)

    def call(inputs):
        n, f_in = inputs.shape
        assert f_in == f
        x_bytes = inputs.dtype.itemsize
        row_bytes = 2 * f * x_bytes + 2 * r_pad * 4
        tm = _pick_block_m(n, row_bytes, resident_weight_bytes)
        grid = (pl.cdiv(n, tm),)
        out = pl.pallas_call(
            _shared_bottom_expert2_kernel,
            out_shape=jax.ShapeDtypeStruct((n, r_pad), jnp.float32),
            grid=grid,
            in_specs=[
                pl.BlockSpec((tm, f), lambda i: (i, 0)),           # batch-tiled
                pl.BlockSpec((f, r_pad), lambda i: (0, 0)),        # resident expert kernel
                pl.BlockSpec((r_pad, r_pad), lambda i: (0, 0)),    # resident W^T
                pl.BlockSpec((1, r_pad), lambda i: (0, 0)),        # resident bias
            ],
            out_specs=pl.BlockSpec((tm, r_pad), lambda i: (i, 0)),
            compiler_params=_compiler_params(tm * row_bytes + resident_weight_bytes),
            cost_estimate=pl.CostEstimate(
                flops=2 * n * f * r_pad + 2 * n * r_pad * r_pad,
                transcendentals=n * r_pad,
                bytes_accessed=(n * f * x_bytes + f * r_pad * 2
                                + r_pad * r_pad * 2 + r_pad * 4 + n * r_pad * 4)),
        )(inputs, wk, wlt, bl)
        return out if r_pad == r else out[:, :r]

    return call


# ----------------------------------------------------------------------------
# References (pure JAX) for sanity checks
# ----------------------------------------------------------------------------

def ref_none_bf16(x, wk):
    aux = jnp.dot(x.astype(jnp.bfloat16), wk.astype(jnp.bfloat16),
                  preferred_element_type=jnp.float32)
    return jnp.maximum(aux, 0.0)


def ref_expert2_bf16(x, wk, lw, lb):
    h = jnp.maximum(jnp.dot(x.astype(jnp.bfloat16), wk.astype(jnp.bfloat16),
                            preferred_element_type=jnp.float32), 0.0)
    z = jnp.dot(h.astype(jnp.bfloat16), jnp.transpose(lw).astype(jnp.bfloat16),
                preferred_element_type=jnp.float32) + lb.astype(jnp.float32)
    return jax.nn.sigmoid(z)


def ref_none_f32(x, wk):
    return jnp.maximum(x @ wk, 0.0)


def ref_expert2_f32(x, wk, lw, lb):
    h = jnp.maximum(x @ wk, 0.0)
    return jax.nn.sigmoid(h @ lw.T + lb)


# ----------------------------------------------------------------------------
# Main
# ----------------------------------------------------------------------------

if __name__ == "__main__":
    # Small shapes consistent with the module's forward:
    #   n (batch) = 8, num_features = 32, runits = [32]
    # NOTE: at these toy shapes the pallas_call is launch/DMA-overhead dominated;
    # the tiling / lane-padding / bf16 pay off at production-scale n / f / r.
    n, num_features, runits = 8, 32, 32

    key = jax.random.PRNGKey(0)
    k_x, k_wk, k_lw, k_lb = jax.random.split(key, 4)

    # inputs
    x = jax.random.normal(k_x, (n, num_features), dtype=jnp.float32)

    # expert_kernels = torch.rand(num_features, runits[0])  ->  U[0, 1)
    wk = jax.random.uniform(k_wk, (num_features, runits), dtype=jnp.float32)

    # nn.Linear(runits, runits): torch default init U(-1/sqrt(in), 1/sqrt(in))
    bound = 1.0 / np.sqrt(runits)
    lw = jax.random.uniform(k_lw, (runits, runits), dtype=jnp.float32,
                            minval=-bound, maxval=bound)
    lb = jax.random.uniform(k_lb, (runits,), dtype=jnp.float32,
                            minval=-bound, maxval=bound)

    # ---- learning_type = None path ----
    sb_none = make_shared_bottom_none(wk)          # one-time weight prep
    out_none = jax.block_until_ready(sb_none(x))
    np.testing.assert_allclose(np.asarray(out_none),
                               np.asarray(ref_none_bf16(x, wk)),
                               rtol=2e-3, atol=2e-3)
    np.testing.assert_allclose(np.asarray(out_none),
                               np.asarray(ref_none_f32(x, wk)),
                               rtol=5e-2, atol=1e-1)   # bf16-quantization tolerance

    # ---- learning_type = 'Expert_2layers' path ----
    sb_e2 = make_shared_bottom_expert2(wk, lw, lb)  # one-time weight prep
    out_e2 = jax.block_until_ready(sb_e2(x))
    np.testing.assert_allclose(np.asarray(out_e2),
                               np.asarray(ref_expert2_bf16(x, wk, lw, lb)),
                               rtol=2e-3, atol=2e-3)
    np.testing.assert_allclose(np.asarray(out_e2),
                               np.asarray(ref_expert2_f32(x, wk, lw, lb)),
                               rtol=5e-2, atol=5e-2)   # sigmoid-bounded, bf16 tolerance

    print("KERNEL_OK")
</pallas_src>

<mosaic_0001>
module attributes {stable_mosaic.version = 11 : i64} {
  func.func @_shared_bottom_none_kernel(%arg0: i32, %arg1: memref<8x32xf32, #tpu.memory_space<vmem>>, %arg2: memref<32x128xbf16, #tpu.memory_space<vmem>>, %arg3: memref<8x128xf32, #tpu.memory_space<vmem>>) attributes {dimension_semantics = [#tpu.dimension_semantics<parallel>], iteration_bounds = array<i64: 1>, scalar_prefetch = 0 : i64, scratch_operands = 0 : i64, tpu.core_type = #tpu.core_type<tc>, window_params = [{transform_indices = @transform_0, window_bounds = array<i64: 8, 32>}, {pipeline_mode = #tpu.pipeline_mode<synchronous>, transform_indices = @transform_1, window_bounds = array<i64: 32, 128>}, {transform_indices = @transform_2, window_bounds = array<i64: 8, 128>}]} {
    %c0 = arith.constant 0 : index
    %c0_0 = arith.constant 0 : index
    %0 = vector.load %arg1[%c0, %c0_0] : memref<8x32xf32, #tpu.memory_space<vmem>>, vector<8x32xf32>
    %1 = arith.truncf %0 : vector<8x32xf32> to vector<8x32xbf16>
    %c0_1 = arith.constant 0 : index
    %c0_2 = arith.constant 0 : index
    %2 = vector.load %arg2[%c0_1, %c0_2] : memref<32x128xbf16, #tpu.memory_space<vmem>>, vector<32x128xbf16>
    %cst = arith.constant dense<0.000000e+00> : vector<8x128xf32>
    %3 = tpu.matmul %1, %2, %cst {dimension_numbers = #tpu.dot_dimension_numbers<[1], [0], [0], [1], [0, 0, 1, 1], [], []>} : vector<8x32xbf16>, vector<32x128xbf16>, vector<8x128xf32> -> vector<8x128xf32>
    %cst_3 = arith.constant 0.000000e+00 : f32
    %4 = vector.broadcast %cst_3 : f32 to vector<8x128xf32>
    %5 = arith.maximumf %3, %4 : vector<8x128xf32>
    %c0_4 = arith.constant 0 : index
    %c0_5 = arith.constant 0 : index
    %6 = vector.load %arg3[%c0_4, %c0_5] : memref<8x128xf32, #tpu.memory_space<vmem>>, vector<8x128xf32>
    tpu.vector_store %arg3[%c0_4, %c0_5], %5 {strides = array<i32>} : memref<8x128xf32, #tpu.memory_space<vmem>>, vector<8x128xf32>,
    return
  }
  func.func @transform_0(%arg0: i32) -> (i32, i32) {
    %c0_i32 = arith.constant 0 : i32
    %c0_i32_0 = arith.constant 0 : i32
    return %arg0, %c0_i32 : i32, i32
  }
  func.func @transform_1(%arg0: i32) -> (i32, i32) {
    %c0_i32 = arith.constant 0 : i32
    %c0_i32_0 = arith.constant 0 : i32
    %c0_i32_1 = arith.constant 0 : i32
    return %c0_i32, %c0_i32_0 : i32, i32
  }
  func.func @transform_2(%arg0: i32) -> (i32, i32) {
    %c0_i32 = arith.constant 0 : i32
    %c0_i32_0 = arith.constant 0 : i32
    return %arg0, %c0_i32 : i32, i32
  }
}

</mosaic_0001>

<llo_original>
// kernel: tpu_custom_call.1
$region0: #{tpu_custom_call.1}
  #allocation0 [shape = 'u32[]', space=smem, size = 0x4, offset = 0x4, fixed_abs, tag = 'smem constant byte address 0x4 - core index']
  #allocation1 [shape = 'u32[72,128]{1,0:T(1,128)}', space=vmem, size = 0x9000, scoped, tag = 'internal scratch']
  %s0 = inlined_call_operand.hbm [shape: f32[8,32], index: 0, kind: input, shape index: {}]
  %s1 = inlined_call_operand.hbm [shape: bf16[32,128], index: 1, kind: input, shape index: {}]
  %s2 = inlined_call_operand.hbm [shape: f32[8,128], index: 2, kind: output, shape index: {}]
  %s3 = sld [smem:[#allocation0]]
  $region26: #{tpu_custom_call.1} parent=0
    _
  %s5 = ssub.s32 1, %s3
  %s6 = scalar_select 0, %s5, %s3
  $region1: #{tpu_custom_call.1} parent=0
    #allocation2 [shape = 'u8[4096]{0}', space=vmem, size = 0x1000, scoped, tag = 'input window, operand 0, single buffered']
    #allocation3 [shape = 's32[1]{0}', space=sflag, size = 0x4, scoped, tag = 'scoped memory for tpu_custom_call.1']
    #allocation4 [shape = 's32[1]{0}', space=sflag, size = 0x4, scoped, tag = 'scoped memory for tpu_custom_call.1']
    #allocation5 [shape = 'u8[8192]{0}', space=vmem, size = 0x2000, scoped, tag = 'input window, operand 1, single buffered']
    #allocation6 [shape = 's32[1]{0}', space=sflag, size = 0x4, scoped, tag = 'scoped memory for tpu_custom_call.1']
    #allocation7 [shape = 'u8[4096]{0}', space=vmem, size = 0x1000, scoped, tag = 'output window, operand 0, single buffered']
    %7 = vsyncpa [#allocation3], 0
    %8 = vsyncpa [#allocation6], 0
    %9 = vsyncpa [#allocation4], 0
    // Predicated region
    $region2: #{tpu_custom_call.1} parent=1 // pred_check
      _
    $region3: #{tpu_custom_call.1} parent=1 // pred_check_branch
      %11 = sbr.rel (0) target = $region5
    $region4: #{tpu_custom_call.1} parent=1 // pred_region
      %13 = vsyncadd [#allocation3], 0
      %s15 = sshll.u32 %s0, 4
      %s16 = int_to_ptr.hbm [resolvable:$true] %s15
      %s17 = sshll.u32 [#allocation2], 4
      %s18 = int_to_ptr.vmem [resolvable:$true] %s17
      %20 = dma.hbm_to_vmem [thread:$0]  %s16, 128, %s18, [#allocation3]
    $region5: #{tpu_custom_call.1} parent=1 // pred_fallthru
      _
    // Predicated region
    $region6: #{tpu_custom_call.1} parent=1 // pred_check
      _
    $region7: #{tpu_custom_call.1} parent=1 // pred_check_branch
      %22 = sbr.rel (0) target = $region9
    $region8: #{tpu_custom_call.1} parent=1 // pred_region
      %24 = vsyncadd [#allocation6], 0
      %s25 = sshll.u32 %s1, 4
      %s26 = int_to_ptr.hbm [resolvable:$true] %s25
      %s27 = sshll.u32 [#allocation5], 4
      %s28 = int_to_ptr.vmem [resolvable:$true] %s27
      %33 = dma.hbm_to_vmem [thread:$0]  %s26, 256, %s28, [#allocation6], 64, 64, 4
    $region9: #{tpu_custom_call.1} parent=1 // pred_fallthru
      _
    // Predicated region
    $region10: #{tpu_custom_call.1} parent=1 // pred_check
      _
    $region11: #{tpu_custom_call.1} parent=1 // pred_check_branch
      %35 = sbr.rel (0) target = $region13
    $region12: #{tpu_custom_call.1} parent=1 // pred_region
      %37 = dma.done [#allocation3], 128
    $region13: #{tpu_custom_call.1} parent=1 // pred_fallthru
      _
    // Predicated region
    $region14: #{tpu_custom_call.1} parent=1 // pred_check
      _
    $region15: #{tpu_custom_call.1} parent=1 // pred_check_branch
      %39 = sbr.rel (0) target = $region17
    $region16: #{tpu_custom_call.1} parent=1 // pred_region
      %41 = dma.done [#allocation6], 256
    $region17: #{tpu_custom_call.1} parent=1 // pred_fallthru
      _
    %v43 = vld [vmem:[#allocation2] sm:$0xff]
    %v44 = vpack.c.bf16 %v43, %v43
    %v45 = vld [vmem:[#allocation5] sm:$0xf]
    %v46 = vld [vmem:[#allocation5 + $0x4] sm:$0xf]
    %v47 = vld [vmem:[#allocation5 + $0x8] sm:$0xf]
    %v48 = vld [vmem:[#allocation5 + $0xc] sm:$0xf]
    %v53 = vunpack.c.l.b16 %v45
    %v54 = vunpack.c.l.b16 %v46
    %v55 = vunpack.c.l.b16 %v47
    %v56 = vunpack.c.l.b16 %v48
    %v57 = vpack.c.b16 %v54, %v53
    %v58 = vpack.c.b16 %v56, %v55
    %vm61 = vcmask 261120
    %v63 = vsel %vm61, %v44, 0
    %65 = vmatpush.bf16.msra.mxu0 0
    %66 = vmatpush.bf16.msra.mxu0 0
    %67 = vmatpush.bf16.msra.mxu0 0
    %68 = vmatpush.bf16.msra.mxu0 0
    %69 = vmatpush.bf16.msra.mxu0 0
    %70 = vmatpush.bf16.msra.mxu0 0
    %71 = vmatpush.bf16.msra.mxu0 %v58
    %72 = vmatpush.bf16.msra.mxu0 %v57
    %73 = vmatmul.bf16.gmra.mxu0 %v63
    %v74 = vpop.f32.mrf.mxu0
    %v75 = vadd.f32 0.0, %v74
    %v76 = vpop.f32.mrf.mxu0
    %77 = vdwg.mxu0
    %v78 = vmax.f32 %v75, 0.0
    %79 = vst [vmem:[#allocation7] sm:$0xff] %v78
    // Predicated region
    $region18: #{tpu_custom_call.1} parent=1 // pred_check
      _
    $region19: #{tpu_custom_call.1} parent=1 // pred_check_branch
      %81 = sbr.rel (0) target = $region21
    $region20: #{tpu_custom_call.1} parent=1 // pred_region
      %83 = vsyncadd [#allocation4], 0
      %s85 = sshll.u32 [#allocation7], 4
      %s86 = int_to_ptr.vmem [resolvable:$true] %s85
      %s87 = sshll.u32 %s2, 4
      %s88 = int_to_ptr.hbm [resolvable:$true] %s87
      %90 = dma.vmem_to_hbm [thread:$0]  %s86, 128, %s88, [#allocation4]
    $region21: #{tpu_custom_call.1} parent=1 // pred_fallthru
      _
    // Predicated region
    $region22: #{tpu_custom_call.1} parent=1 // pred_check
      _
    $region23: #{tpu_custom_call.1} parent=1 // pred_check_branch
      %92 = sbr.rel (0) target = $region25
    $region24: #{tpu_custom_call.1} parent=1 // pred_region
      %94 = dma.done [#allocation4], 128
    $region25: #{tpu_custom_call.1} parent=1 // pred_fallthru
      _
    %95 = vsyncpa [#allocation3], 1
    %96 = vsyncpa [#allocation6], 1
    %97 = vsyncpa [#allocation4], 1

</llo_original>
